<compile_context>
chip_gen: v7x
topology: tpu7x:2x2x1
jax: 0.10.0
libtpu: 0.0.40
codegen_flags: <defaults>
</compile_context>

<pallas_src>
import jax
import jax.numpy as jnp
from jax.experimental import pallas as pl
from jax.experimental.pallas import tpu as pltpu


def _assemble_kernel(ctx_ref,      # VMEM (1, n_ctx*D)          per-batch shifted context (lane-flat)
                     prefix_ref,   # VMEM (class_tile, D)        SOS embedding per class
                     suffix_ref,   # VMEM (class_tile, n_suf*D)  class-name + EOS embeddings (lane-flat)
                     out_ref):     # VMEM (class_tile, total_tokens*D)
    tc = prefix_ref.shape[0]
    d = prefix_ref.shape[1]
    nctx_d = ctx_ref.shape[1]
    # All three lane offsets are multiples of ctx_dim (>= 128 for CLIP), so every segment
    # store is a full-lane, unmasked vst; the ctx broadcast over the class tile is a cheap
    # sublane replicate.  No sublane-misaligned token-axis concatenation.
    out_ref[:, 0:d] = prefix_ref[...].astype(out_ref.dtype)
    out_ref[:, d:d + nctx_d] = jnp.broadcast_to(ctx_ref[...], (tc, nctx_d)).astype(out_ref.dtype)
    out_ref[:, d + nctx_d:] = suffix_ref[...].astype(out_ref.dtype)


def _scoped_vmem_limit_bytes():
    """Generation-aware scoped-VMEM budget: ~75% of physical, capped at 100 MiB.
    -> ~48 MiB on v7x (64 MiB/core physical), ~96 MiB on v5e/v6e (128 MiB physical)."""
    cap = 128 * 1024 * 1024
    try:
        info = pltpu.get_tpu_info()
        cap = int(getattr(info, "vmem_capacity_bytes", cap) or cap)
    except Exception:
        pass
    return int(min((cap * 3) // 4, 100 * 1024 * 1024))


def prompt_learner_forward(im_features, ctx, scorer_w, scorer_b,
                           token_prefix, token_suffix,
                           *, class_tile=None, out_dtype=None):
    """im_features: (B, vis_dim) -> prompts: (B, n_cls, 1 + n_ctx + n_suf, ctx_dim)."""
    B, vis_dim = im_features.shape
    n_ctx, ctx_dim = ctx.shape
    n_cls = token_prefix.shape[0]
    n_suf = token_suffix.shape[1]
    total_tokens = 1 + n_ctx + n_suf
    if out_dtype is None:
        # Downstream text-encoder dtype (= clip_model.dtype).  Store token_prefix /
        # token_suffix in bf16 (and hence emit bf16) to halve the HBM bytes of this
        # data-movement-bound kernel.
        out_dtype = token_prefix.dtype

    # ---- scorer + tanh + softmax + context shift: tiny (B, n_ctx) math, once, in XLA ----
    f32 = jnp.float32
    w = scorer_w.astype(f32)[0]
    s_img = im_features.astype(f32) @ w[:vis_dim] + scorer_b.astype(f32)[0]     # (B,)
    s_ctx = ctx.astype(f32) @ w[vis_dim:]                                       # (n_ctx,)
    scores = jnp.tanh(s_img[:, None] + s_ctx[None, :])                          # (B, n_ctx)
    attn = jax.nn.softmax(scores, axis=1)                                       # (B, n_ctx)
    c_upd = attn @ ctx.astype(f32)                                              # (B, D)
    ctx_shifted = ctx.astype(f32)[None, :, :] + c_upd[:, None, :]               # (B, n_ctx, D)
    ctx_flat = ctx_shifted.reshape(B, 1, n_ctx * ctx_dim)                       # lane-flattened

    # ---- lane-flattened / dense-2D views of the frozen buffers (free: contiguous) ----
    prefix2d = token_prefix.reshape(n_cls, ctx_dim)
    suffix2d = token_suffix.reshape(n_cls, n_suf * ctx_dim)

    # ---- class tile from a VMEM byte budget; no divisibility requirement on n_cls ----
    vmem_limit = _scoped_vmem_limit_bytes()
    if class_tile is None:
        in_bytes = jnp.dtype(token_suffix.dtype).itemsize
        out_bytes = jnp.dtype(out_dtype).itemsize
        # double-buffered prefix + suffix + output blocks per class row
        per_class = 2 * ctx_dim * ((1 + n_suf) * in_bytes + total_tokens * out_bytes)
        budget = (vmem_limit * 2) // 3
        t = max(1, budget // per_class)
        class_tile = n_cls if t >= n_cls else max(8, (t // 8) * 8)
    class_tile = min(int(class_tile), n_cls)
    # class_tile sits in the second-to-last dim of the prefix/suffix/output blocks, so it
    # must be a multiple of 8 sublanes or cover all classes.
    assert class_tile == n_cls or class_tile % 8 == 0, \
        "class_tile must be a multiple of 8 (or equal to n_cls)"
    n_class_tiles = pl.cdiv(n_cls, class_tile)   # ragged last tile handled by Pallas masking

    out_flat = pl.pallas_call(
        _assemble_kernel,
        out_shape=jax.ShapeDtypeStruct((B, n_cls, total_tokens * ctx_dim), out_dtype),
        grid_spec=pltpu.PrefetchScalarGridSpec(
            num_scalar_prefetch=0,
            # Class tiles OUTERMOST, batch innermost: prefix/suffix block indices are
            # constant across the inner batch loop, so their HBM reads happen once per
            # class tile instead of once per (class tile, batch).
            grid=(n_class_tiles, B),
            in_specs=[
                pl.BlockSpec((None, 1, n_ctx * ctx_dim), lambda j, b: (b, 0, 0)),   # ctx_shifted
                pl.BlockSpec((class_tile, ctx_dim), lambda j, b: (j, 0)),           # token_prefix
                pl.BlockSpec((class_tile, n_suf * ctx_dim), lambda j, b: (j, 0)),   # token_suffix
            ],
            out_specs=pl.BlockSpec((None, class_tile, total_tokens * ctx_dim),
                                   lambda j, b: (b, j, 0)),
        ),
        compiler_params=pltpu.CompilerParams(
            # Class-tile axis parallel (keeps both v7x TensorCores busy even at B=1-8);
            # batch axis sequential within a core.
            dimension_semantics=("parallel", "arbitrary"),
            vmem_limit_bytes=vmem_limit,
        ),
    )(ctx_flat, prefix2d, suffix2d)

    # Reshape back to the module's 4-D layout (free: trailing dims are contiguous).
    return out_flat.reshape(B, n_cls, total_tokens, ctx_dim)


def reference_forward(im_features, ctx, scorer_w, scorer_b, token_prefix, token_suffix):
    """Pure-JAX reference mirroring the PyTorch forward."""
    B, vis_dim = im_features.shape
    n_ctx, ctx_dim = ctx.shape
    n_cls = token_prefix.shape[0]
    s_exp = jnp.broadcast_to(im_features[:, None, :], (B, n_ctx, vis_dim))
    ctx_exp = jnp.broadcast_to(ctx[None, :, :], (B, n_ctx, ctx_dim))
    concat = jnp.concatenate([s_exp, ctx_exp], axis=-1)
    scores = jnp.tanh(concat @ scorer_w.T + scorer_b)[..., 0]
    attn = jax.nn.softmax(scores, axis=1)
    C = jnp.sum(attn[..., None] * ctx_exp, axis=1)
    ctx_shifted = ctx[None, :, :] + C[:, None, :]
    prompts = jnp.concatenate([
        jnp.broadcast_to(token_prefix[None], (B, n_cls) + token_prefix.shape[1:]),
        jnp.broadcast_to(ctx_shifted[:, None, :, :], (B, n_cls, n_ctx, ctx_dim)),
        jnp.broadcast_to(token_suffix[None], (B, n_cls) + token_suffix.shape[1:]),
    ], axis=2)
    return prompts


if __name__ == "__main__":
    # Small, deterministic synthetic setup consistent with the module's __init__.
    B = 2          # batch size
    vis_dim = 64   # clip_model.visual.output_dim (stand-in)
    ctx_dim = 128  # clip_model.ln_final.weight.shape[0] (stand-in, lane-dense)
    n_ctx = 4      # fixed in __init__ (ctx_init == '')
    n_cls = 12     # len(classnames)
    n_suf = 11     # suffix tokens (stand-in for 77 - 1 - n_ctx in real CLIP)

    key = jax.random.PRNGKey(0)
    k_im, k_ctx, k_w, k_b, k_pre, k_suf = jax.random.split(key, 6)

    im_features = jax.random.normal(k_im, (B, vis_dim), dtype=jnp.float32)
    # nn.init.normal_(ctx_vectors, std=0.02)
    ctx = 0.02 * jax.random.normal(k_ctx, (n_ctx, ctx_dim), dtype=jnp.float32)
    # nn.Linear(vis_dim + ctx_dim, 1): weight (1, vis_dim + ctx_dim), bias (1,)
    scorer_w = 0.1 * jax.random.normal(k_w, (1, vis_dim + ctx_dim), dtype=jnp.float32)
    scorer_b = 0.1 * jax.random.normal(k_b, (1,), dtype=jnp.float32)
    # token_prefix / token_suffix buffers (stand-in for frozen CLIP token embeddings)
    token_prefix = jax.random.normal(k_pre, (n_cls, 1, ctx_dim), dtype=jnp.float32)
    token_suffix = jax.random.normal(k_suf, (n_cls, n_suf, ctx_dim), dtype=jnp.float32)

    ref = reference_forward(im_features, ctx, scorer_w, scorer_b, token_prefix, token_suffix)

    # class_tile=8 with n_cls=12 -> 2 class tiles (one ragged): exercises the pl.cdiv
    # partial-block path and the class-outermost / batch-innermost DMA dedup.
    out = prompt_learner_forward(im_features, ctx, scorer_w, scorer_b,
                                 token_prefix, token_suffix, class_tile=8)
    out = jax.block_until_ready(out)
    assert out.shape == (B, n_cls, 1 + n_ctx + n_suf, ctx_dim), out.shape
    assert jnp.allclose(out, ref, atol=1e-5, rtol=1e-5), "f32 mismatch vs reference"

    # bf16 output path (the byte-halving fast path recommended for production), with the
    # auto (VMEM-budget) class_tile; tolerance loosened for bf16 rounding only.
    out_bf16 = prompt_learner_forward(im_features, ctx, scorer_w, scorer_b,
                                      token_prefix, token_suffix,
                                      out_dtype=jnp.bfloat16)
    out_bf16 = jax.block_until_ready(out_bf16)
    assert jnp.allclose(out_bf16.astype(jnp.float32), ref, atol=5e-2, rtol=0.0), \
        "bf16 mismatch vs reference"

    print("KERNEL_OK")
</pallas_src>

<mosaic_0001>
module attributes {stable_mosaic.version = 11 : i64} {
  func.func @_assemble_kernel(%arg0: i32, %arg1: i32, %arg2: memref<1x1x512xf32, #tpu.memory_space<vmem>>, %arg3: memref<8x128xf32, #tpu.memory_space<vmem>>, %arg4: memref<8x1408xf32, #tpu.memory_space<vmem>>, %arg5: memref<1x8x2048xf32, #tpu.memory_space<vmem>>) attributes {dimension_semantics = [#tpu.dimension_semantics<parallel>, #tpu.dimension_semantics<arbitrary>], iteration_bounds = array<i64: 2, 2>, scalar_prefetch = 0 : i64, scratch_operands = 0 : i64, tpu.core_type = #tpu.core_type<tc>, window_params = [{transform_indices = @transform_0, window_bounds = array<i64: 1, 1, 512>}, {transform_indices = @transform_1, window_bounds = array<i64: 8, 128>}, {transform_indices = @transform_2, window_bounds = array<i64: 8, 1408>}, {transform_indices = @transform_3, window_bounds = array<i64: 1, 8, 2048>}]} {
    %c0 = arith.constant 0 : index
    %c0_0 = arith.constant 0 : index
    %0 = vector.load %arg3[%c0, %c0_0] : memref<8x128xf32, #tpu.memory_space<vmem>>, vector<8x128xf32>
    %c0_1 = arith.constant 0 : index
    %c0_2 = arith.constant 0 : index
    %c0_3 = arith.constant 0 : index
    %1 = vector.load %arg5[%c0_1, %c0_2, %c0_3] : memref<1x8x2048xf32, #tpu.memory_space<vmem>>, vector<1x8x128xf32>
    %2 = vector.shape_cast %1 : vector<1x8x128xf32> to vector<8x128xf32>
    %3 = vector.shape_cast %0 : vector<8x128xf32> to vector<1x8x128xf32>
    tpu.vector_store %arg5[%c0_1, %c0_2, %c0_3], %3 {strides = array<i32>} : memref<1x8x2048xf32, #tpu.memory_space<vmem>>, vector<1x8x128xf32>,
    %c0_4 = arith.constant 0 : index
    %c0_5 = arith.constant 0 : index
    %c0_6 = arith.constant 0 : index
    %4 = vector.load %arg2[%c0_4, %c0_5, %c0_6] : memref<1x1x512xf32, #tpu.memory_space<vmem>>, vector<1x1x512xf32>
    %5 = vector.shape_cast %4 : vector<1x1x512xf32> to vector<1x512xf32>
    %6 = vector.shape_cast %5 : vector<1x512xf32> to vector<1x512xf32>
    %7 = vector.broadcast %6 : vector<1x512xf32> to vector<8x512xf32>
    %c0_7 = arith.constant 0 : index
    %c0_8 = arith.constant 0 : index
    %c128 = arith.constant 128 : index
    %8 = vector.load %arg5[%c0_7, %c0_8, %c128] : memref<1x8x2048xf32, #tpu.memory_space<vmem>>, vector<1x8x512xf32>
    %9 = vector.shape_cast %8 : vector<1x8x512xf32> to vector<8x512xf32>
    %10 = vector.shape_cast %7 : vector<8x512xf32> to vector<1x8x512xf32>
    tpu.vector_store %arg5[%c0_7, %c0_8, %c128], %10 {strides = array<i32>} : memref<1x8x2048xf32, #tpu.memory_space<vmem>>, vector<1x8x512xf32>,
    %c0_9 = arith.constant 0 : index
    %c0_10 = arith.constant 0 : index
    %11 = vector.load %arg4[%c0_9, %c0_10] : memref<8x1408xf32, #tpu.memory_space<vmem>>, vector<8x1408xf32>
    %c0_11 = arith.constant 0 : index
    %c0_12 = arith.constant 0 : index
    %c640 = arith.constant 640 : index
    %12 = vector.load %arg5[%c0_11, %c0_12, %c640] : memref<1x8x2048xf32, #tpu.memory_space<vmem>>, vector<1x8x1408xf32>
    %13 = vector.shape_cast %12 : vector<1x8x1408xf32> to vector<8x1408xf32>
    %14 = vector.shape_cast %11 : vector<8x1408xf32> to vector<1x8x1408xf32>
    tpu.vector_store %arg5[%c0_11, %c0_12, %c640], %14 {strides = array<i32>} : memref<1x8x2048xf32, #tpu.memory_space<vmem>>, vector<1x8x1408xf32>,
    return
  }
  func.func @transform_0(%arg0: i32, %arg1: i32) -> (i32, i32, i32) {
    %c0_i32 = arith.constant 0 : i32
    %c0_i32_0 = arith.constant 0 : i32
    %c0_i32_1 = arith.constant 0 : i32
    return %arg1, %c0_i32, %c0_i32_0 : i32, i32, i32
  }
  func.func @transform_1(%arg0: i32, %arg1: i32) -> (i32, i32) {
    %c0_i32 = arith.constant 0 : i32
    %c0_i32_0 = arith.constant 0 : i32
    return %arg0, %c0_i32 : i32, i32
  }
  func.func @transform_2(%arg0: i32, %arg1: i32) -> (i32, i32) {
    %c0_i32 = arith.constant 0 : i32
    %c0_i32_0 = arith.constant 0 : i32
    return %arg0, %c0_i32 : i32, i32
  }
  func.func @transform_3(%arg0: i32, %arg1: i32) -> (i32, i32, i32) {
    %c0_i32 = arith.constant 0 : i32
    %c0_i32_0 = arith.constant 0 : i32
    return %arg1, %arg0, %c0_i32 : i32, i32, i32
  }
}

</mosaic_0001>

<llo_original>
// kernel: tpu_custom_call.1
$region0: #{tpu_custom_call.1}
  #allocation0 [shape = 'u32[]', space=smem, size = 0x4, offset = 0x4, fixed_abs, tag = 'smem constant byte address 0x4 - core index']
  #allocation1 [shape = 'u32[144,128]{1,0:T(1,128)}', space=vmem, size = 0x12000, scoped, tag = 'internal scratch']
  %s0 = inlined_call_operand.hbm [shape: f32[2,1,512], index: 0, kind: input, shape index: {}]
  %s1 = inlined_call_operand.hbm [shape: f32[12,128], index: 1, kind: input, shape index: {}]
  %s2 = inlined_call_operand.hbm [shape: f32[12,1408], index: 2, kind: input, shape index: {}]
  %s3 = inlined_call_operand.hbm [shape: f32[2,12,2048], index: 3, kind: output, shape index: {}]
  %s4 = sld [smem:[#allocation0]]
  $region57: #{tpu_custom_call.1} parent=0
    _
  %s6 = ssub.s32 1, %s4
  %s7 = scalar_select 0, %s6, %s4
  $region1: #{tpu_custom_call.1} parent=0
    #allocation2 [shape = 'u8[4096]{0}', space=vmem, size = 0x1000, scoped, tag = 'input window, operand 0']
    #allocation3 [shape = 's32[2]{0}', space=sflag, size = 0x8, scoped, tag = 'scoped memory for tpu_custom_call.1']
    #allocation4 [shape = 's32[2]{0}', space=sflag, size = 0x8, scoped, tag = 'scoped memory for tpu_custom_call.1']
    #allocation5 [shape = 'u8[8192]{0}', space=vmem, size = 0x2000, scoped, tag = 'input window, operand 1']
    #allocation6 [shape = 's32[2]{0}', space=sflag, size = 0x8, scoped, tag = 'scoped memory for tpu_custom_call.1']
    #allocation7 [shape = 'u8[90112]{0}', space=vmem, size = 0x16000, scoped, tag = 'input window, operand 2']
    #allocation8 [shape = 'u8[131072]{0}', space=vmem, size = 0x20000, scoped, tag = 'output window, operand 0']
    %8 = vsyncpa [#allocation3], 0
    %s9 = scalar_lea.sflag [#allocation3], 1
    %10 = vsyncpa %s9, 0
    %11 = vsyncpa [#allocation6], 0
    %s12 = scalar_lea.sflag [#allocation6], 1
    %13 = vsyncpa %s12, 0
    %14 = vsyncpa [#allocation4], 0
    %s15 = scalar_lea.sflag [#allocation4], 1
    %16 = vsyncpa %s15, 0
    loop: start=0, step=1, limit=6
    $region2: #{tpu_custom_call.1} parent=1 // loop_pre_header
      _
    $region3: #{tpu_custom_call.1} parent=1 // loop_header
      %s18 = sphi 0, %s22
      %p19 = scmp.ge.s32.totalorder %s18, 6
      %s25 = sphi 0, %s37
      %s26 = sphi 0, %s33
      %s27 = sphi 0, %s25
      %s28 = sphi 0, %s26
      %s29 = sphi 0, %s27
      %s30 = sphi 0, %s28
      %s40 = sphi 0, %s42
      %s43 = sphi 0, %s40
      %s44 = sphi 0, %s43
      %s60 = sphi 0, %s44
      %s66 = sphi 0, %s68
      %s69 = sphi 0, %s66
      %s70 = sphi 0, %s69
      %s86 = sphi 0, %s70
      %s92 = sphi 0, %s94
      %s95 = sphi 0, %s92
      %s96 = sphi 0, %s95
      %s112 = sphi 0, %s96
      %s120 = sphi 0, %s122
      %s123 = sphi 0, %s120
      %s124 = sphi 0, %s123
      %s140 = sphi 0, %s124
    $region4: #{tpu_custom_call.1} parent=1 // loop_header_branch
      %21 = sbr.rel (%p19) target = $region8
    $region5: #{tpu_custom_call.1} parent=1 // loop_body
      %s23 = ssub.s32 %s18, 1
      %s24 = ssub.s32 %s18, 2
      %s31 = sadd.s32 1, %s26
      %p32 = scmp.ge.s32.totalorder %s31, 2
      %s33 = scalar_select %p32, 0, %s31
      %s34 = sadd.s32 1, %s25
      %s35 = scalar_select %p32, %s34, %s25
      %p36 = scmp.ge.s32.totalorder %s35, 2
      %s37 = scalar_select %p36, 0, %s35
      %s38 = ssub.s32 %s26, %s33
      %p39 = scmp.eq.s32.totalorder %s38, 0
      %s41 = sadd.s32 %s40, 1
      %s42 = scalar_select %p39, %s40, %s41
      %p45 = pneg %p39
      %p46 = scmp.eq.s32.totalorder %s18, 3
      %p47 = por %p45, %p46
      %p48 = scmp.ne.s32.totalorder %s40, %s43
      %p49 = scmp.eq.s32.totalorder %s18, 0
      %p50 = por %p48, %p49
      %p51 = scmp.ne.s32.totalorder %s40, %s43
      %p52 = scmp.eq.s32.totalorder %s23, 3
      %p53 = por %p51, %p52
      %p54 = scmp.ne.s32.totalorder %s43, %s44
      %p55 = scmp.eq.s32.totalorder %s23, 0
      %p56 = por %p54, %p55
      %p57 = scmp.ne.s32.totalorder %s43, %s44
      %p58 = scmp.eq.s32.totalorder %s24, 3
      %p59 = por %p57, %p58
      %p61 = scmp.ne.s32.totalorder %s44, %s60
      %p62 = scmp.eq.s32.totalorder %s24, 0
      %p63 = por %p61, %p62
      %s64 = ssub.s32 %s25, %s37
      %p65 = scmp.eq.s32.totalorder %s64, 0
      %s67 = sadd.s32 %s66, 1
      %s68 = scalar_select %p65, %s66, %s67
      %p71 = pneg %p65
      %p72 = scmp.eq.s32.totalorder %s18, 3
      %p73 = por %p71, %p72
      %p74 = scmp.ne.s32.totalorder %s66, %s69
      %p75 = scmp.eq.s32.totalorder %s18, 0
      %p76 = por %p74, %p75
      %p77 = scmp.ne.s32.totalorder %s66, %s69
      %p78 = scmp.eq.s32.totalorder %s23, 3
      %p79 = por %p77, %p78
      %p80 = scmp.ne.s32.totalorder %s69, %s70
      %p81 = scmp.eq.s32.totalorder %s23, 0
      %p82 = por %p80, %p81
      %p83 = scmp.ne.s32.totalorder %s69, %s70
      %p84 = scmp.eq.s32.totalorder %s24, 3
      %p85 = por %p83, %p84
      %p87 = scmp.ne.s32.totalorder %s70, %s86
      %p88 = scmp.eq.s32.totalorder %s24, 0
      %p89 = por %p87, %p88
      %s90 = ssub.s32 %s25, %s37
      %p91 = scmp.eq.s32.totalorder %s90, 0
      %s93 = sadd.s32 %s92, 1
      %s94 = scalar_select %p91, %s92, %s93
      %p97 = pneg %p91
      %p98 = scmp.eq.s32.totalorder %s18, 3
      %p99 = por %p97, %p98
      %p100 = scmp.ne.s32.totalorder %s92, %s95
      %p101 = scmp.eq.s32.totalorder %s18, 0
      %p102 = por %p100, %p101
      %p103 = scmp.ne.s32.totalorder %s92, %s95
      %p104 = scmp.eq.s32.totalorder %s23, 3
      %p105 = por %p103, %p104
      %p106 = scmp.ne.s32.totalorder %s95, %s96
      %p107 = scmp.eq.s32.totalorder %s23, 0
      %p108 = por %p106, %p107
      %p109 = scmp.ne.s32.totalorder %s95, %s96
      %p110 = scmp.eq.s32.totalorder %s24, 3
      %p111 = por %p109, %p110
      %p113 = scmp.ne.s32.totalorder %s96, %s112
      %p114 = scmp.eq.s32.totalorder %s24, 0
      %p115 = por %p113, %p114
      %s116 = ssub.s32 %s26, %s33
      %s117 = ssub.s32 %s25, %s37
      %s118 = sor.u32 %s116, %s117
      %p119 = scmp.eq.s32.totalorder %s118, 0
      %s121 = sadd.s32 %s120, 1
      %s122 = scalar_select %p119, %s120, %s121
      %p125 = pneg %p119
      %p126 = scmp.eq.s32.totalorder %s18, 3
      %p127 = por %p125, %p126
      %p128 = scmp.ne.s32.totalorder %s120, %s123
      %p129 = scmp.eq.s32.totalorder %s18, 0
      %p130 = por %p128, %p129
      %p131 = scmp.ne.s32.totalorder %s120, %s123
      %p132 = scmp.eq.s32.totalorder %s23, 3
      %p133 = por %p131, %p132
      %p134 = scmp.ne.s32.totalorder %s123, %s124
      %p135 = scmp.eq.s32.totalorder %s23, 0
      %p136 = por %p134, %p135
      %p137 = scmp.ne.s32.totalorder %s123, %s124
      %p138 = scmp.eq.s32.totalorder %s24, 3
      %p139 = por %p137, %p138
      %p141 = scmp.ne.s32.totalorder %s124, %s140
      %p142 = scmp.eq.s32.totalorder %s24, 0
      %p143 = por %p141, %p142
      %p144 = scmp.le.s32.totalorder 1, %s18
      %p145 = scmp.lt.s32.totalorder %s18, 5
      %p146 = pnand %p144, %p145
      %p147 = pneg %p146
      // Predicated region
      $region9: #{tpu_custom_call.1} parent=5 // pred_check
        _
      $region10: #{tpu_custom_call.1} parent=5 // pred_check_branch
        %149 = sbr.rel (%p146) target = $region12
      $region11: #{tpu_custom_call.1} parent=5 // pred_region
        %s150 = ssub.s32 %s18, 1
      $region12: #{tpu_custom_call.1} parent=5 // pred_fallthru
        _
      %p151 = scmp.lt.s32.totalorder %s18, 4
      // Predicated region
      $region13: #{tpu_custom_call.1} parent=5 // pred_check
        %p152 = pneg %p151
      $region14: #{tpu_custom_call.1} parent=5 // pred_check_branch
        %154 = sbr.rel (%p152) target = $region16
      $region15: #{tpu_custom_call.1} parent=5 // pred_region
        // Predicated region
        $region17: #{tpu_custom_call.1} parent=15 // pred_check
          %p155 = pneg %p50
        $region18: #{tpu_custom_call.1} parent=15 // pred_check_branch
          %157 = sbr.rel (%p155) target = $region20
        $region19: #{tpu_custom_call.1} parent=15 // pred_region
          %s158 = sand.u32 %s40, 1
          %s159 = scalar_lea.sflag [#allocation3], %s158
          %s160 = sand.u32 %s40, 1
          %s161 = smul.addr %s160, 4
          %s162 = scalar_lea.vmem [#allocation2], %s161
          %s164 = ssub.s32 64, 64
          %165 = vsyncadd %s159, %s164
          %s166 = smul.addr %s26, 4
          %s167 = smul.addr %s166, 16
          %s168 = scalar_lea.hbm %s0, %s167
          %s170 = sshll.u32 %s162, 4
          %s171 = int_to_ptr.vmem [resolvable:$true] %s170
          %173 = dma.hbm_to_vmem [thread:$0]  %s168, 64, %s171, %s159
        $region20: #{tpu_custom_call.1} parent=15 // pred_fallthru
          _
        // Predicated region
        $region21: #{tpu_custom_call.1} parent=15 // pred_check
          %p174 = pneg %p76
        $region22: #{tpu_custom_call.1} parent=15 // pred_check_branch
          %176 = sbr.rel (%p174) target = $region24
        $region23: #{tpu_custom_call.1} parent=15 // pred_region
          %s177 = sand.u32 %s18, 1
          %s178 = scalar_lea.sflag [#allocation6], %s177
          %s179 = sand.u32 %s66, 1
          %s180 = smul.addr %s179, 8
          %s181 = scalar_lea.vmem [#allocation5], %s180
          %s183 = ssub.s32 128, 128
          %184 = vsyncadd %s178, %s183
          %s185 = smul.addr %s25, 128
          %s186 = scalar_lea.hbm %s1, %s185
          %s188 = sshll.u32 %s181, 4
          %s189 = int_to_ptr.vmem [resolvable:$true] %s188
          %191 = dma.hbm_to_vmem [thread:$0]  %s186, 128, %s189, %s178
        $region24: #{tpu_custom_call.1} parent=15 // pred_fallthru
          _
        // Predicated region
        $region25: #{tpu_custom_call.1} parent=15 // pred_check
          %p192 = pneg %p102
        $region26: #{tpu_custom_call.1} parent=15 // pred_check_branch
          %194 = sbr.rel (%p192) target = $region28
        $region27: #{tpu_custom_call.1} parent=15 // pred_region
          %s195 = sand.u32 %s18, 1
          %s196 = scalar_lea.sflag [#allocation6], %s195
          %s197 = sand.u32 %s92, 1
          %s198 = smul.addr %s197, 88
          %s199 = scalar_lea.vmem [#allocation7], %s198
          %s201 = ssub.s32 1408, 1408
          %202 = vsyncadd %s196, %s201
          %s203 = smul.addr %s25, 11
          %s204 = smul.addr %s203, 128
          %s205 = scalar_lea.hbm %s2, %s204
          %s207 = sshll.u32 %s199, 4
          %s208 = int_to_ptr.vmem [resolvable:$true] %s207
          %210 = dma.hbm_to_vmem [thread:$0]  %s205, 1408, %s208, %s196
        $region28: #{tpu_custom_call.1} parent=15 // pred_fallthru
          _
      $region16: #{tpu_custom_call.1} parent=5 // pred_fallthru
        _
      %p211 = scmp.le.s32.totalorder 1, %s18
      %p212 = scmp.lt.s32.totalorder %s18, 5
      %p213 = pnand %p211, %p212
      %p214 = pneg %p213
      // Predicated region
      $region29: #{tpu_custom_call.1} parent=5 // pred_check
        _
      $region30: #{tpu_custom_call.1} parent=5 // pred_check_branch
        %216 = sbr.rel (%p213) target = $region32
      $region31: #{tpu_custom_call.1} parent=5 // pred_region
        %s217 = ssub.s32 %s18, 1
        %s218 = sand.u32 %s43, 1
        %s219 = scalar_lea.sflag [#allocation3], %s218
        %s220 = sand.u32 %s43, 1
        %s221 = smul.addr %s220, 4
        %s222 = scalar_lea.vmem [#allocation2], %s221
        // Predicated region
        $region33: #{tpu_custom_call.1} parent=31 // pred_check
          %p223 = pneg %p56
        $region34: #{tpu_custom_call.1} parent=31 // pred_check_branch
          %225 = sbr.rel (%p223) target = $region36
        $region35: #{tpu_custom_call.1} parent=31 // pred_region
          %226 = dma.done %s219, 64
        $region36: #{tpu_custom_call.1} parent=31 // pred_fallthru
          _
        %s227 = sand.u32 %s23, 1
        %s228 = scalar_lea.sflag [#allocation6], %s227
        %s229 = sand.u32 %s69, 1
        %s230 = smul.addr %s229, 8
        %s231 = scalar_lea.vmem [#allocation5], %s230
        // Predicated region
        $region37: #{tpu_custom_call.1} parent=31 // pred_check
          %p232 = pneg %p82
        $region38: #{tpu_custom_call.1} parent=31 // pred_check_branch
          %234 = sbr.rel (%p232) target = $region40
        $region39: #{tpu_custom_call.1} parent=31 // pred_region
          %235 = dma.done %s228, 128
        $region40: #{tpu_custom_call.1} parent=31 // pred_fallthru
          _
        %s236 = sand.u32 %s23, 1
        %s237 = scalar_lea.sflag [#allocation6], %s236
        %s238 = sand.u32 %s95, 1
        %s239 = smul.addr %s238, 88
        %s240 = scalar_lea.vmem [#allocation7], %s239
        // Predicated region
        $region41: #{tpu_custom_call.1} parent=31 // pred_check
          %p241 = pneg %p108
        $region42: #{tpu_custom_call.1} parent=31 // pred_check_branch
          %243 = sbr.rel (%p241) target = $region44
        $region43: #{tpu_custom_call.1} parent=31 // pred_region
          %244 = dma.done %s237, 1408
        $region44: #{tpu_custom_call.1} parent=31 // pred_fallthru
          _
        %s245 = sand.u32 %s43, 1
        %s246 = scalar_lea.sflag [#allocation3], %s245
        %s247 = sand.u32 %s43, 1
        %s248 = smul.addr %s247, 4
        %s249 = scalar_lea.vmem [#allocation2], %s248
        %p250 = pneg %p56
        %p251 = pneg %p53
        %s252 = sand.u32 %s23, 1
        %s253 = scalar_lea.sflag [#allocation6], %s252
        %s254 = sand.u32 %s69, 1
        %s255 = smul.addr %s254, 8
        %s256 = scalar_lea.vmem [#allocation5], %s255
        %p257 = pneg %p82
        %p258 = pneg %p79
        %s259 = sand.u32 %s23, 1
        %s260 = scalar_lea.sflag [#allocation6], %s259
        %s261 = sand.u32 %s95, 1
        %s262 = smul.addr %s261, 88
        %s263 = scalar_lea.vmem [#allocation7], %s262
        %p264 = pneg %p108
        %p265 = pneg %p105
        %p266 = pneg %p136
        %p267 = pneg %p133
        %s268 = sand.u32 %s123, 1
        %s269 = scalar_lea.sflag [#allocation4], %s268
        %s270 = sand.u32 %s123, 1
        %s271 = smul.addr %s270, 128
        %s272 = scalar_lea.vmem [#allocation8], %s271
        %v273 = vld [vmem:[%s231] sm:$0xff]
        %274 = vst [vmem:[%s272] sm:$0xff] %v273
        %v275 = vld [vmem:[%s222] sm:$0xf]
        %v277 = vlaneseq
        %v278 = vshrl.u32 %v277, 7
        %v279 = vsub.s32 0, %v278
        %v280 = vrot.slane %v275, %v279
        %v281 = vlaneseq
        %v282 = vshrl.u32 %v281, 7
        %v283 = vsub.s32 1, %v282
        %v284 = vrot.slane %v275, %v283
        %v285 = vlaneseq
        %v286 = vshrl.u32 %v285, 7
        %v287 = vsub.s32 2, %v286
        %v288 = vrot.slane %v275, %v287
        %v289 = vlaneseq
        %v290 = vshrl.u32 %v289, 7
        %v291 = vsub.s32 3, %v290
        %v292 = vrot.slane %v275, %v291
        %297 = vst [vmem:[%s272 + $0x8] sm:$0xff] %v280
        %298 = vst [vmem:[%s272 + $0x10] sm:$0xff] %v284
        %299 = vst [vmem:[%s272 + $0x18] sm:$0xff] %v288
        %300 = vst [vmem:[%s272 + $0x20] sm:$0xff] %v292
        %v301 = vld [vmem:[%s240] sm:$0xff]
        %v302 = vld [vmem:[%s240 + $0x8] sm:$0xff]
        %v303 = vld [vmem:[%s240 + $0x10] sm:$0xff]
        %v304 = vld [vmem:[%s240 + $0x18] sm:$0xff]
        %v305 = vld [vmem:[%s240 + $0x20] sm:$0xff]
        %v306 = vld [vmem:[%s240 + $0x28] sm:$0xff]
        %v307 = vld [vmem:[%s240 + $0x30] sm:$0xff]
        %v308 = vld [vmem:[%s240 + $0x38] sm:$0xff]
        %v309 = vld [vmem:[%s240 + $0x40] sm:$0xff]
        %v310 = vld [vmem:[%s240 + $0x48] sm:$0xff]
        %v311 = vld [vmem:[%s240 + $0x50] sm:$0xff]
        %312 = vst [vmem:[%s272 + $0x28] sm:$0xff] %v301
        %313 = vst [vmem:[%s272 + $0x30] sm:$0xff] %v302
        %314 = vst [vmem:[%s272 + $0x38] sm:$0xff] %v303
        %315 = vst [vmem:[%s272 + $0x40] sm:$0xff] %v304
        %316 = vst [vmem:[%s272 + $0x48] sm:$0xff] %v305
        %317 = vst [vmem:[%s272 + $0x50] sm:$0xff] %v306
        %318 = vst [vmem:[%s272 + $0x58] sm:$0xff] %v307
        %319 = vst [vmem:[%s272 + $0x60] sm:$0xff] %v308
        %320 = vst [vmem:[%s272 + $0x68] sm:$0xff] %v309
        %321 = vst [vmem:[%s272 + $0x70] sm:$0xff] %v310
        %322 = vst [vmem:[%s272 + $0x78] sm:$0xff] %v311
        %s323 = sand.u32 %s123, 1
        %s324 = scalar_lea.sflag [#allocation4], %s323
        %s325 = sand.u32 %s123, 1
        %s326 = smul.addr %s325, 128
        %s327 = scalar_lea.vmem [#allocation8], %s326
        // Predicated region
        $region45: #{tpu_custom_call.1} parent=31 // pred_check
          %p328 = pneg %p133
        $region46: #{tpu_custom_call.1} parent=31 // pred_check_branch
          %330 = sbr.rel (%p328) target = $region48
        $region47: #{tpu_custom_call.1} parent=31 // pred_region
          %s332 = ssub.s32 2048, 2048
          %333 = vsyncadd %s324, %s332
          %s334 = smul.addr %s27, 16
          %s335 = smul.addr %s28, 32
          %s336 = sadd.s32 %s334, %s335
          %s337 = smul.addr %s336, 128
          %s338 = scalar_lea.hbm %s3, %s337
          %s340 = sshll.u32 %s327, 4
          %s341 = int_to_ptr.vmem [resolvable:$true] %s340
          %343 = dma.vmem_to_hbm [thread:$0]  %s341, 2048, %s338, %s324
        $region48: #{tpu_custom_call.1} parent=31 // pred_fallthru
          _
      $region32: #{tpu_custom_call.1} parent=5 // pred_fallthru
        _
      %p344 = scmp.le.s32.totalorder 2, %s18
      // Predicated region
      $region49: #{tpu_custom_call.1} parent=5 // pred_check
        %p345 = pneg %p344
      $region50: #{tpu_custom_call.1} parent=5 // pred_check_branch
        %347 = sbr.rel (%p345) target = $region52
      $region51: #{tpu_custom_call.1} parent=5 // pred_region
        %s348 = ssub.s32 %s18, 2
        // Predicated region
        $region53: #{tpu_custom_call.1} parent=51 // pred_check
          %p349 = pneg %p139
        $region54: #{tpu_custom_call.1} parent=51 // pred_check_branch
          %351 = sbr.rel (%p349) target = $region56
        $region55: #{tpu_custom_call.1} parent=51 // pred_region
          %s352 = sand.u32 %s124, 1
          %s353 = scalar_lea.sflag [#allocation4], %s352
          %s354 = sand.u32 %s124, 1
          %s355 = smul.addr %s354, 128
          %s356 = scalar_lea.vmem [#allocation8], %s355
          %357 = dma.done %s353, 2048
        $region56: #{tpu_custom_call.1} parent=51 // pred_fallthru
          _
      $region52: #{tpu_custom_call.1} parent=5 // pred_fallthru
        _
    $region6: #{tpu_custom_call.1} parent=1 // loop_footer
      %s22 = sadd.s32 1, %s18
    $region7: #{tpu_custom_call.1} parent=1 // loop_footer_branch
      %17 = sbr.rel target = $region3
    $region8: #{tpu_custom_call.1} parent=1 // loop_exit
      _
    %358 = vsyncpa [#allocation3], 1
    %s359 = scalar_lea.sflag [#allocation3], 1
    %360 = vsyncpa %s359, 1
    %361 = vsyncpa [#allocation6], 1
    %s362 = scalar_lea.sflag [#allocation6], 1
    %363 = vsyncpa %s362, 1
    %364 = vsyncpa [#allocation4], 1
    %s365 = scalar_lea.sflag [#allocation4], 1
    %366 = vsyncpa %s365, 1

</llo_original>
